<compile_context>
chip_gen: v5e
topology: v5e:2x2
jax: 0.10.0
libtpu: 0.0.40
codegen_flags: <defaults>
</compile_context>

<pallas_src>
import math

import jax
import jax.numpy as jnp
from jax.experimental import pallas as pl
from jax.experimental.pallas import tpu as pltpu


# Max lane-width of a streamed weight/output tile (f32).  Chosen so that a
# double-buffered (latent_dim, TN) weight tile stays well inside the default
# scoped VMEM even on v7x (64 MiB physical / 32 MiB default scoped):
# e.g. latent_dim=1024 -> 2 * 1024 * 2048 * 4 B = 16 MiB for the weight stream.
_MAX_TN = 2048


def _decoder_kernel(x_ref, w_ref, b_ref, o_ref):
    # x_ref: (B, K)  resident activation tile (same block for every grid step)
    # w_ref: (K, TN) streamed weight tile
    # b_ref: (1, TN) streamed bias tile
    # o_ref: (B, TN) output tile
    acc = jnp.dot(x_ref[...], w_ref[...], preferred_element_type=jnp.float32)
    o_ref[...] = (acc + b_ref[...].astype(jnp.float32)).astype(o_ref.dtype)


def _choose_tn(out_features):
    """Largest lane-dense tile width that evenly divides out_features."""
    if out_features <= _MAX_TN:
        # Full-extent block: no (8,128) divisibility requirement applies.
        return out_features
    assert out_features % 128 == 0, (
        "tiled weight-streaming path requires out_features to be a multiple of 128"
    )
    m = out_features // 128
    t = min(m, _MAX_TN // 128)
    while m % t != 0:
        t -= 1
    return t * 128


def latent_space_decoder(x, weight_t, bias, hidden_dim, decoding_length, tn=None):
    """
    x:        (batch, latent_dim)                       float32
    weight_t: (latent_dim, hidden_dim*decoding_length)  float32 (== torch weight.T)
    bias:     (hidden_dim*decoding_length,)             float32
    returns:  (batch, decoding_length, hidden_dim)
    """
    batch, latent_dim = x.shape
    out_features = hidden_dim * decoding_length
    assert weight_t.shape == (latent_dim, out_features)
    assert bias.shape == (out_features,)

    if tn is None:
        tn = _choose_tn(out_features)
    assert out_features % tn == 0, "tile width must evenly divide out_features"
    assert tn == out_features or tn % 128 == 0, "tile width must be lane-dense"

    num_tiles = out_features // tn
    bias2d = bias.reshape(1, out_features)

    x_bytes = jnp.dtype(x.dtype).itemsize
    w_bytes = jnp.dtype(weight_t.dtype).itemsize

    # Explicit scoped-VMEM budget: double-buffered streamed tiles + resident x,
    # with headroom for compiler internal scratch.  Stays tiny relative to any
    # generation's VMEM for sane tile sizes.
    vmem_needed = (
        2 * w_bytes * (latent_dim * tn + tn)      # weight + bias double buffers
        + 2 * x_bytes * batch * tn                # output double buffer
        + 2 * x_bytes * batch * latent_dim        # resident x (double-buffered)
    )
    vmem_limit = max(int(vmem_needed * 1.5) + (2 << 20), 8 * 1024 * 1024)

    cost = pl.CostEstimate(
        flops=2 * batch * latent_dim * out_features,
        transcendentals=0,
        bytes_accessed=(
            w_bytes * latent_dim * out_features                     # weight stream
            + x_bytes * (batch * latent_dim                         # x
                         + out_features                             # bias
                         + batch * out_features)                    # output
        ),
    )

    y = pl.pallas_call(
        _decoder_kernel,
        out_shape=jax.ShapeDtypeStruct((batch, out_features), x.dtype),
        grid_spec=pltpu.PrefetchScalarGridSpec(
            num_scalar_prefetch=0,
            grid=(num_tiles,),
            in_specs=[
                # x is resident: same block index for every grid step -> loaded once.
                pl.BlockSpec((batch, latent_dim), lambda j: (0, 0)),
                # weight streamed over N.
                pl.BlockSpec((latent_dim, tn), lambda j: (0, j)),
                # bias streamed over N (per-tile slice, not the whole row).
                pl.BlockSpec((1, tn), lambda j: (0, j)),
            ],
            out_specs=pl.BlockSpec((batch, tn), lambda j: (0, j)),
        ),
        compiler_params=pltpu.CompilerParams(
            # Independent output column tiles: parallel lets v7x shard the N
            # axis across both TensorCores; harmless on single-TC v5e/v6e.
            dimension_semantics=("parallel",),
            vmem_limit_bytes=vmem_limit,
        ),
        cost_estimate=cost,
    )(x, weight_t, bias2d)

    # Same semantics as torch .view(batch, decoding_length, hidden_dim)
    # (row-major reshape — free, done outside the kernel).
    return y.reshape(batch, decoding_length, hidden_dim)

    # TODO(synk): optionally store weight_t/bias as bfloat16 at the call site
    # (keeping the f32 MXU accumulation) to halve the HBM weight stream; kept
    # f32 here to match torch Linear bit-for-bit within fp tolerance.


def init_params(key, latent_dim, hidden_dim, decoding_length):
    """Deterministic init mirroring torch.nn.Linear default (kaiming-uniform-ish)."""
    out_features = hidden_dim * decoding_length
    k_w, k_b = jax.random.split(key)
    bound = 1.0 / math.sqrt(latent_dim)
    # torch stores weight as (out_features, in_features); we keep its transpose.
    weight = jax.random.uniform(
        k_w, (out_features, latent_dim), jnp.float32, minval=-bound, maxval=bound
    )
    bias = jax.random.uniform(
        k_b, (out_features,), jnp.float32, minval=-bound, maxval=bound
    )
    return weight.T, bias


if __name__ == "__main__":
    # Small shapes consistent with the module's forward.
    batch = 2
    latent_dim = 32
    hidden_dim = 32
    decoding_length = 8          # out_features = 256

    key = jax.random.PRNGKey(0)
    k_x, k_p = jax.random.split(key)

    x = jax.random.normal(k_x, (batch, latent_dim), dtype=jnp.float32)
    weight_t, bias = init_params(k_p, latent_dim, hidden_dim, decoding_length)

    # tn=128 exercises the multi-step weight-streaming grid (2 tiles) even at
    # this small size; production calls can leave tn=None for auto-selection.
    out = latent_space_decoder(
        x, weight_t, bias, hidden_dim, decoding_length, tn=128
    )
    out = jax.block_until_ready(out)

    # Reference check in plain JAX.
    ref = (x @ weight_t + bias).reshape(batch, decoding_length, hidden_dim)
    assert out.shape == (batch, decoding_length, hidden_dim), out.shape
    assert jnp.allclose(out, ref, atol=1e-5, rtol=1e-5)

    # Also check the auto-tiled path (full-width block at this small size).
    out2 = jax.block_until_ready(
        latent_space_decoder(x, weight_t, bias, hidden_dim, decoding_length)
    )
    assert jnp.allclose(out2, ref, atol=1e-5, rtol=1e-5)

    print("KERNEL_OK")
</pallas_src>

<mosaic_0001>
module attributes {stable_mosaic.version = 11 : i64} {
  func.func @_decoder_kernel(%arg0: i32, %arg1: memref<2x32xf32, #tpu.memory_space<vmem>>, %arg2: memref<32x128xf32, #tpu.memory_space<vmem>>, %arg3: memref<1x128xf32, #tpu.memory_space<vmem>>, %arg4: memref<2x128xf32, #tpu.memory_space<vmem>>) attributes {dimension_semantics = [#tpu.dimension_semantics<parallel>], iteration_bounds = array<i64: 2>, scalar_prefetch = 0 : i64, scratch_operands = 0 : i64, tpu.core_type = #tpu.core_type<tc>, window_params = [{pipeline_mode = #tpu.pipeline_mode<synchronous>, transform_indices = @transform_0, window_bounds = array<i64: 2, 32>}, {transform_indices = @transform_1, window_bounds = array<i64: 32, 128>}, {transform_indices = @transform_2, window_bounds = array<i64: 1, 128>}, {transform_indices = @transform_3, window_bounds = array<i64: 2, 128>}]} {
    %c0 = arith.constant 0 : index
    %c0_0 = arith.constant 0 : index
    %0 = vector.load %arg1[%c0, %c0_0] : memref<2x32xf32, #tpu.memory_space<vmem>>, vector<2x32xf32>
    %c0_1 = arith.constant 0 : index
    %c0_2 = arith.constant 0 : index
    %1 = vector.load %arg2[%c0_1, %c0_2] : memref<32x128xf32, #tpu.memory_space<vmem>>, vector<32x128xf32>
    %cst = arith.constant dense<0.000000e+00> : vector<2x128xf32>
    %2 = tpu.matmul %0, %1, %cst {dimension_numbers = #tpu.dot_dimension_numbers<[1], [0], [0], [1], [0, 0, 1, 1], [], []>} : vector<2x32xf32>, vector<32x128xf32>, vector<2x128xf32> -> vector<2x128xf32>
    %c0_3 = arith.constant 0 : index
    %c0_4 = arith.constant 0 : index
    %3 = vector.load %arg3[%c0_3, %c0_4] : memref<1x128xf32, #tpu.memory_space<vmem>>, vector<1x128xf32>
    %4 = vector.broadcast %3 : vector<1x128xf32> to vector<2x128xf32>
    %5 = arith.addf %2, %4 : vector<2x128xf32>
    %c0_5 = arith.constant 0 : index
    %c0_6 = arith.constant 0 : index
    %6 = vector.load %arg4[%c0_5, %c0_6] : memref<2x128xf32, #tpu.memory_space<vmem>>, vector<2x128xf32>
    tpu.vector_store %arg4[%c0_5, %c0_6], %5 {strides = array<i32>} : memref<2x128xf32, #tpu.memory_space<vmem>>, vector<2x128xf32>,
    return
  }
  func.func @transform_0(%arg0: i32) -> (i32, i32) {
    %c0_i32 = arith.constant 0 : i32
    %c0_i32_0 = arith.constant 0 : i32
    %c0_i32_1 = arith.constant 0 : i32
    return %c0_i32, %c0_i32_0 : i32, i32
  }
  func.func @transform_1(%arg0: i32) -> (i32, i32) {
    %c0_i32 = arith.constant 0 : i32
    %c0_i32_0 = arith.constant 0 : i32
    return %c0_i32, %arg0 : i32, i32
  }
  func.func @transform_2(%arg0: i32) -> (i32, i32) {
    %c0_i32 = arith.constant 0 : i32
    %c0_i32_0 = arith.constant 0 : i32
    return %c0_i32, %arg0 : i32, i32
  }
  func.func @transform_3(%arg0: i32) -> (i32, i32) {
    %c0_i32 = arith.constant 0 : i32
    %c0_i32_0 = arith.constant 0 : i32
    return %c0_i32, %arg0 : i32, i32
  }
}

</mosaic_0001>

<llo_original>
// kernel: tpu_custom_call.1
$region0: #{tpu_custom_call.1}
  #allocation0 [shape = 'u32[]', space=smem, size = 0x4, offset = 0x4, fixed_abs, tag = 'smem constant byte address 0x4 - core index']
  #allocation1 [shape = 'u32[72,128]{1,0:T(1,128)}', space=vmem, size = 0x9000, scoped, tag = 'internal scratch']
  %s0 = inlined_call_operand.hbm [shape: f32[2,32], index: 0, kind: input, shape index: {}]
  %s1 = inlined_call_operand.hbm [shape: f32[32,256], index: 1, kind: input, shape index: {}]
  %s2 = inlined_call_operand.hbm [shape: f32[1,256], index: 2, kind: input, shape index: {}]
  %s3 = inlined_call_operand.hbm [shape: f32[2,256], index: 3, kind: output, shape index: {}]
  %s4 = sld [smem:[#allocation0]]
  $region57: #{tpu_custom_call.1} parent=0
    _
  %s6 = ssub.s32 1, %s4
  %s7 = scalar_select 0, %s6, %s4
  $region1: #{tpu_custom_call.1} parent=0
    #allocation2 [shape = 'u8[1024]{0}', space=vmem, size = 0x400, scoped, tag = 'input window, operand 0, single buffered']
    #allocation3 [shape = 's32[2]{0}', space=sflag, size = 0x8, scoped, tag = 'scoped memory for tpu_custom_call.1']
    #allocation4 [shape = 's32[2]{0}', space=sflag, size = 0x8, scoped, tag = 'scoped memory for tpu_custom_call.1']
    #allocation5 [shape = 'u8[32768]{0}', space=vmem, size = 0x8000, scoped, tag = 'input window, operand 1']
    #allocation6 [shape = 's32[2]{0}', space=sflag, size = 0x8, scoped, tag = 'scoped memory for tpu_custom_call.1']
    #allocation7 [shape = 'u8[1024]{0}', space=vmem, size = 0x400, scoped, tag = 'input window, operand 2']
    #allocation8 [shape = 'u8[2048]{0}', space=vmem, size = 0x800, scoped, tag = 'output window, operand 0']
    %8 = vsyncpa [#allocation3], 0
    %9 = vsyncpa [#allocation6], 0
    %s10 = scalar_lea.sflag [#allocation6], 1
    %11 = vsyncpa %s10, 0
    %12 = vsyncpa [#allocation4], 0
    %s13 = scalar_lea.sflag [#allocation4], 1
    %14 = vsyncpa %s13, 0
    loop: start=0, step=1, limit=4
    $region2: #{tpu_custom_call.1} parent=1 // loop_pre_header
      _
    $region3: #{tpu_custom_call.1} parent=1 // loop_header
      %s16 = sphi 0, %s20
      %p17 = scmp.ge.s32.totalorder %s16, 4
      %s24 = sphi 0, %s24
      %s26 = sphi 0, %s24
      %s27 = sphi 0, %s26
      %s41 = sphi 0, %s27
      %s47 = sphi 0, %s49
      %s50 = sphi 0, %s47
      %s51 = sphi 0, %s50
      %s67 = sphi 0, %s51
      %s73 = sphi 0, %s75
      %s76 = sphi 0, %s73
      %s77 = sphi 0, %s76
      %s93 = sphi 0, %s77
      %s99 = sphi 0, %s101
      %s102 = sphi 0, %s99
      %s103 = sphi 0, %s102
      %s119 = sphi 0, %s103
    $region4: #{tpu_custom_call.1} parent=1 // loop_header_branch
      %19 = sbr.rel (%p17) target = $region8
    $region5: #{tpu_custom_call.1} parent=1 // loop_body
      %s21 = ssub.s32 %s16, 1
      %s22 = ssub.s32 %s16, 2
      %s23 = sadd.s32 %s16, 1
      %s25 = sadd.s32 %s24, 1
      %p28 = scmp.eq.s32.totalorder %s16, 1
      %p29 = scmp.ne.s32.totalorder %s24, %s26
      %p30 = scmp.eq.s32.totalorder %s16, 0
      %p31 = por %p29, %p30
      %p32 = scmp.ne.s32.totalorder %s24, %s26
      %p33 = scmp.eq.s32.totalorder %s21, 1
      %p34 = por %p32, %p33
      %p35 = scmp.ne.s32.totalorder %s26, %s27
      %p36 = scmp.eq.s32.totalorder %s21, 0
      %p37 = por %p35, %p36
      %p38 = scmp.ne.s32.totalorder %s26, %s27
      %p39 = scmp.eq.s32.totalorder %s22, 1
      %p40 = por %p38, %p39
      %p42 = scmp.ne.s32.totalorder %s27, %s41
      %p43 = scmp.eq.s32.totalorder %s22, 0
      %p44 = por %p42, %p43
      %s45 = ssub.s32 %s16, %s23
      %p46 = scmp.eq.s32.totalorder %s45, 0
      %s48 = sadd.s32 %s47, 1
      %s49 = scalar_select %p46, %s47, %s48
      %p52 = pneg %p46
      %p53 = scmp.eq.s32.totalorder %s16, 1
      %p54 = por %p52, %p53
      %p55 = scmp.ne.s32.totalorder %s47, %s50
      %p56 = scmp.eq.s32.totalorder %s16, 0
      %p57 = por %p55, %p56
      %p58 = scmp.ne.s32.totalorder %s47, %s50
      %p59 = scmp.eq.s32.totalorder %s21, 1
      %p60 = por %p58, %p59
      %p61 = scmp.ne.s32.totalorder %s50, %s51
      %p62 = scmp.eq.s32.totalorder %s21, 0
      %p63 = por %p61, %p62
      %p64 = scmp.ne.s32.totalorder %s50, %s51
      %p65 = scmp.eq.s32.totalorder %s22, 1
      %p66 = por %p64, %p65
      %p68 = scmp.ne.s32.totalorder %s51, %s67
      %p69 = scmp.eq.s32.totalorder %s22, 0
      %p70 = por %p68, %p69
      %s71 = ssub.s32 %s16, %s23
      %p72 = scmp.eq.s32.totalorder %s71, 0
      %s74 = sadd.s32 %s73, 1
      %s75 = scalar_select %p72, %s73, %s74
      %p78 = pneg %p72
      %p79 = scmp.eq.s32.totalorder %s16, 1
      %p80 = por %p78, %p79
      %p81 = scmp.ne.s32.totalorder %s73, %s76
      %p82 = scmp.eq.s32.totalorder %s16, 0
      %p83 = por %p81, %p82
      %p84 = scmp.ne.s32.totalorder %s73, %s76
      %p85 = scmp.eq.s32.totalorder %s21, 1
      %p86 = por %p84, %p85
      %p87 = scmp.ne.s32.totalorder %s76, %s77
      %p88 = scmp.eq.s32.totalorder %s21, 0
      %p89 = por %p87, %p88
      %p90 = scmp.ne.s32.totalorder %s76, %s77
      %p91 = scmp.eq.s32.totalorder %s22, 1
      %p92 = por %p90, %p91
      %p94 = scmp.ne.s32.totalorder %s77, %s93
      %p95 = scmp.eq.s32.totalorder %s22, 0
      %p96 = por %p94, %p95
      %s97 = ssub.s32 %s16, %s23
      %p98 = scmp.eq.s32.totalorder %s97, 0
      %s100 = sadd.s32 %s99, 1
      %s101 = scalar_select %p98, %s99, %s100
      %p104 = pneg %p98
      %p105 = scmp.eq.s32.totalorder %s16, 1
      %p106 = por %p104, %p105
      %p107 = scmp.ne.s32.totalorder %s99, %s102
      %p108 = scmp.eq.s32.totalorder %s16, 0
      %p109 = por %p107, %p108
      %p110 = scmp.ne.s32.totalorder %s99, %s102
      %p111 = scmp.eq.s32.totalorder %s21, 1
      %p112 = por %p110, %p111
      %p113 = scmp.ne.s32.totalorder %s102, %s103
      %p114 = scmp.eq.s32.totalorder %s21, 0
      %p115 = por %p113, %p114
      %p116 = scmp.ne.s32.totalorder %s102, %s103
      %p117 = scmp.eq.s32.totalorder %s22, 1
      %p118 = por %p116, %p117
      %p120 = scmp.ne.s32.totalorder %s103, %s119
      %p121 = scmp.eq.s32.totalorder %s22, 0
      %p122 = por %p120, %p121
      %p123 = scmp.le.s32.totalorder 1, %s16
      %p124 = scmp.lt.s32.totalorder %s16, 3
      %p125 = pnand %p123, %p124
      %p126 = pneg %p125
      // Predicated region
      $region9: #{tpu_custom_call.1} parent=5 // pred_check
        _
      $region10: #{tpu_custom_call.1} parent=5 // pred_check_branch
        %128 = sbr.rel (%p125) target = $region12
      $region11: #{tpu_custom_call.1} parent=5 // pred_region
        %s129 = ssub.s32 %s16, 1
        // Predicated region
        $region13: #{tpu_custom_call.1} parent=11 // pred_check
          %p130 = pneg %p37
        $region14: #{tpu_custom_call.1} parent=11 // pred_check_branch
          %132 = sbr.rel (%p130) target = $region16
        $region15: #{tpu_custom_call.1} parent=11 // pred_region
          %134 = vsyncadd [#allocation3], 0
          %s136 = sshll.u32 %s0, 4
          %s137 = int_to_ptr.hbm [resolvable:$true] %s136
          %s138 = sshll.u32 [#allocation2], 4
          %s139 = int_to_ptr.vmem [resolvable:$true] %s138
          %141 = dma.hbm_to_vmem [thread:$0]  %s137, 32, %s139, [#allocation3]
        $region16: #{tpu_custom_call.1} parent=11 // pred_fallthru
          _
      $region12: #{tpu_custom_call.1} parent=5 // pred_fallthru
        _
      %p142 = scmp.lt.s32.totalorder %s16, 2
      // Predicated region
      $region17: #{tpu_custom_call.1} parent=5 // pred_check
        %p143 = pneg %p142
      $region18: #{tpu_custom_call.1} parent=5 // pred_check_branch
        %145 = sbr.rel (%p143) target = $region20
      $region19: #{tpu_custom_call.1} parent=5 // pred_region
        // Predicated region
        $region21: #{tpu_custom_call.1} parent=19 // pred_check
          %p146 = pneg %p57
        $region22: #{tpu_custom_call.1} parent=19 // pred_check_branch
          %148 = sbr.rel (%p146) target = $region24
        $region23: #{tpu_custom_call.1} parent=19 // pred_region
          %s149 = sand.u32 %s16, 1
          %s150 = scalar_lea.sflag [#allocation6], %s149
          %s151 = sand.u32 %s47, 1
          %s152 = smul.addr %s151, 32
          %s153 = scalar_lea.vmem [#allocation5], %s152
          %155 = vsyncadd %s150, 0
          %s156 = smul.addr %s16, 8
          %s157 = scalar_lea.hbm %s1, %s156
          %s158 = sshll.u32 %s157, 4
          %s159 = int_to_ptr.hbm [resolvable:$true] %s158
          %s160 = sshll.u32 %s153, 4
          %s161 = int_to_ptr.vmem [resolvable:$true] %s160
          %166 = dma.hbm_to_vmem [thread:$0]  %s159, 512, %s161, %s150, 256, 128, 8
        $region24: #{tpu_custom_call.1} parent=19 // pred_fallthru
          _
        // Predicated region
        $region25: #{tpu_custom_call.1} parent=19 // pred_check
          %p167 = pneg %p83
        $region26: #{tpu_custom_call.1} parent=19 // pred_check_branch
          %169 = sbr.rel (%p167) target = $region28
        $region27: #{tpu_custom_call.1} parent=19 // pred_region
          %s170 = sand.u32 %s16, 1
          %s171 = scalar_lea.sflag [#allocation6], %s170
          %s172 = sand.u32 %s73, 1
          %s173 = scalar_lea.vmem [#allocation7], %s172
          %175 = vsyncadd %s171, 0
          %s176 = scalar_lea.hbm %s2, %s16
          %s178 = sshll.u32 %s176, 4
          %s179 = int_to_ptr.hbm [resolvable:$true] %s178
          %s180 = sshll.u32 %s173, 4
          %s181 = int_to_ptr.vmem [resolvable:$true] %s180
          %183 = dma.hbm_to_vmem [thread:$0]  %s179, 16, %s181, %s171
        $region28: #{tpu_custom_call.1} parent=19 // pred_fallthru
          _
      $region20: #{tpu_custom_call.1} parent=5 // pred_fallthru
        _
      %p184 = scmp.le.s32.totalorder 1, %s16
      %p185 = scmp.lt.s32.totalorder %s16, 3
      %p186 = pnand %p184, %p185
      %p187 = pneg %p186
      // Predicated region
      $region29: #{tpu_custom_call.1} parent=5 // pred_check
        _
      $region30: #{tpu_custom_call.1} parent=5 // pred_check_branch
        %189 = sbr.rel (%p186) target = $region32
      $region31: #{tpu_custom_call.1} parent=5 // pred_region
        %s190 = ssub.s32 %s16, 1
        // Predicated region
        $region33: #{tpu_custom_call.1} parent=31 // pred_check
          %p191 = pneg %p37
        $region34: #{tpu_custom_call.1} parent=31 // pred_check_branch
          %193 = sbr.rel (%p191) target = $region36
        $region35: #{tpu_custom_call.1} parent=31 // pred_region
          %195 = dma.done [#allocation3], 32
        $region36: #{tpu_custom_call.1} parent=31 // pred_fallthru
          _
        %s196 = sand.u32 %s21, 1
        %s197 = scalar_lea.sflag [#allocation6], %s196
        %s198 = sand.u32 %s50, 1
        %s199 = smul.addr %s198, 32
        %s200 = scalar_lea.vmem [#allocation5], %s199
        // Predicated region
        $region37: #{tpu_custom_call.1} parent=31 // pred_check
          %p201 = pneg %p63
        $region38: #{tpu_custom_call.1} parent=31 // pred_check_branch
          %203 = sbr.rel (%p201) target = $region40
        $region39: #{tpu_custom_call.1} parent=31 // pred_region
          %205 = dma.done %s197, 512
        $region40: #{tpu_custom_call.1} parent=31 // pred_fallthru
          _
        %s206 = sand.u32 %s21, 1
        %s207 = scalar_lea.sflag [#allocation6], %s206
        %s208 = sand.u32 %s76, 1
        %s209 = scalar_lea.vmem [#allocation7], %s208
        // Predicated region
        $region41: #{tpu_custom_call.1} parent=31 // pred_check
          %p210 = pneg %p89
        $region42: #{tpu_custom_call.1} parent=31 // pred_check_branch
          %212 = sbr.rel (%p210) target = $region44
        $region43: #{tpu_custom_call.1} parent=31 // pred_region
          %214 = dma.done %s207, 16
        $region44: #{tpu_custom_call.1} parent=31 // pred_fallthru
          _
        %p215 = pneg %p37
        %p216 = pneg %p34
        %s217 = sand.u32 %s21, 1
        %s218 = scalar_lea.sflag [#allocation6], %s217
        %s219 = sand.u32 %s50, 1
        %s220 = smul.addr %s219, 32
        %s221 = scalar_lea.vmem [#allocation5], %s220
        %p222 = pneg %p63
        %p223 = pneg %p60
        %s224 = sand.u32 %s21, 1
        %s225 = scalar_lea.sflag [#allocation6], %s224
        %s226 = sand.u32 %s76, 1
        %s227 = scalar_lea.vmem [#allocation7], %s226
        %p228 = pneg %p89
        %p229 = pneg %p86
        %p230 = pneg %p115
        %p231 = pneg %p112
        %s232 = sand.u32 %s102, 1
        %s233 = scalar_lea.sflag [#allocation4], %s232
        %s234 = sand.u32 %s102, 1
        %s235 = smul.addr %s234, 2
        %s236 = scalar_lea.vmem [#allocation8], %s235
        %v237 = vld [vmem:[#allocation2] sm:$0x3]
        %v238 = vld [vmem:[%s200] sm:$0xff]
        %v239 = vld [vmem:[%s200 + $0x8] sm:$0xff]
        %v240 = vld [vmem:[%s200 + $0x10] sm:$0xff]
        %v241 = vld [vmem:[%s200 + $0x18] sm:$0xff]
        %v242 = vld [vmem:[%s209] sm:$0x1]
        %v244 = vperm.slane %v242, 0
        %vm246 = vcmask 261120
        %v248 = vsel %vm246, %v237, 0
        %250 = vmatpush.msra.mxu0 0.0
        %251 = vmatpush.msra.mxu0 0.0
        %252 = vmatpush.msra.mxu0 0.0
        %253 = vmatpush.msra.mxu0 0.0
        %254 = vmatpush.msra.mxu0 0.0
        %255 = vmatpush.msra.mxu0 0.0
        %256 = vmatpush.msra.mxu0 0.0
        %257 = vmatpush.msra.mxu0 0.0
        %258 = vmatpush.msra.mxu0 0.0
        %259 = vmatpush.msra.mxu0 0.0
        %260 = vmatpush.msra.mxu0 0.0
        %261 = vmatpush.msra.mxu0 0.0
        %262 = vmatpush.msra.mxu0 %v241
        %263 = vmatpush.msra.mxu0 %v240
        %264 = vmatpush.msra.mxu0 %v239
        %265 = vmatpush.msra.mxu0 %v238
        %266 = vmatmul.f32.gmra.mxu0 %v248
        %v267 = vpop.f32.mrf.mxu0
        %v268 = vadd.f32 %v244, %v267
        %269 = vdwg.mxu0
        %270 = vst [vmem:[%s236] sm:$0x3] %v268
        %s271 = sand.u32 %s102, 1
        %s272 = scalar_lea.sflag [#allocation4], %s271
        %s273 = sand.u32 %s102, 1
        %s274 = smul.addr %s273, 2
        %s275 = scalar_lea.vmem [#allocation8], %s274
        // Predicated region
        $region45: #{tpu_custom_call.1} parent=31 // pred_check
          %p276 = pneg %p112
        $region46: #{tpu_custom_call.1} parent=31 // pred_check_branch
          %278 = sbr.rel (%p276) target = $region48
        $region47: #{tpu_custom_call.1} parent=31 // pred_region
          %280 = vsyncadd %s272, 0
          %s281 = smul.addr %s21, 2
          %s282 = scalar_lea.hbm %s3, %s281
          %s284 = sshll.u32 %s275, 4
          %s285 = int_to_ptr.vmem [resolvable:$true] %s284
          %s286 = sshll.u32 %s282, 4
          %s287 = int_to_ptr.hbm [resolvable:$true] %s286
          %289 = dma.vmem_to_hbm [thread:$0]  %s285, 32, %s287, %s272
        $region48: #{tpu_custom_call.1} parent=31 // pred_fallthru
          _
      $region32: #{tpu_custom_call.1} parent=5 // pred_fallthru
        _
      %p290 = scmp.le.s32.totalorder 2, %s16
      // Predicated region
      $region49: #{tpu_custom_call.1} parent=5 // pred_check
        %p291 = pneg %p290
      $region50: #{tpu_custom_call.1} parent=5 // pred_check_branch
        %293 = sbr.rel (%p291) target = $region52
      $region51: #{tpu_custom_call.1} parent=5 // pred_region
        %s294 = ssub.s32 %s16, 2
        // Predicated region
        $region53: #{tpu_custom_call.1} parent=51 // pred_check
          %p295 = pneg %p118
        $region54: #{tpu_custom_call.1} parent=51 // pred_check_branch
          %297 = sbr.rel (%p295) target = $region56
        $region55: #{tpu_custom_call.1} parent=51 // pred_region
          %s298 = sand.u32 %s103, 1
          %s299 = scalar_lea.sflag [#allocation4], %s298
          %s300 = sand.u32 %s103, 1
          %s301 = smul.addr %s300, 2
          %s302 = scalar_lea.vmem [#allocation8], %s301
          %304 = dma.done %s299, 32
        $region56: #{tpu_custom_call.1} parent=51 // pred_fallthru
          _
      $region52: #{tpu_custom_call.1} parent=5 // pred_fallthru
        _
    $region6: #{tpu_custom_call.1} parent=1 // loop_footer
      %s20 = sadd.s32 1, %s16
    $region7: #{tpu_custom_call.1} parent=1 // loop_footer_branch
      %15 = sbr.rel target = $region3
    $region8: #{tpu_custom_call.1} parent=1 // loop_exit
      _
    %305 = vsyncpa [#allocation3], 1
    %s306 = scalar_lea.sflag [#allocation3], 1
    %307 = vsyncpa %s306, 1
    %308 = vsyncpa [#allocation6], 1
    %s309 = scalar_lea.sflag [#allocation6], 1
    %310 = vsyncpa %s309, 1
    %311 = vsyncpa [#allocation4], 1
    %s312 = scalar_lea.sflag [#allocation4], 1
    %313 = vsyncpa %s312, 1

</llo_original>
